<compile_context>
chip_gen: v7x
topology: tpu7x:2x2x1
jax: 0.10.0
libtpu: 0.0.40
codegen_flags: <defaults>
</compile_context>

<pallas_src>
import functools

import jax
import jax.numpy as jnp
from jax.experimental import pallas as pl
from jax.experimental.pallas import tpu as pltpu

_SUBLANE = 8


def _round_up(n, m):
    return ((n + m - 1) // m) * m


def _vmem_capacity_bytes():
    try:
        return int(pltpu.get_tpu_info().vmem_capacity_bytes)
    except Exception:  # off-TPU build / older jax: assume the smallest (v7x) part
        return 64 * 1024 * 1024


_VMEM_CAPACITY = _vmem_capacity_bytes()
# Leave headroom for Mosaic-internal scratch: ~108 MiB on 128 MiB parts
# (v5e/v6e), ~54 MiB on v7x's 64 MiB VMEM.
_VMEM_BUDGET = int(0.85 * _VMEM_CAPACITY)


def _choose_batch_tile(b8, target_rows, min_steps=8):
    """Largest multiple-of-8 tile that divides b8, <= target_rows, and (when the
    batch is big enough) leaves at least `min_steps` grid steps for pipelining
    and multi-TensorCore sharding."""
    m = b8 // _SUBLANE
    if b8 >= min_steps * _SUBLANE:
        cap_rows = max(_SUBLANE, (b8 // min_steps) // _SUBLANE * _SUBLANE)
    else:
        cap_rows = b8
    target_rows = max(_SUBLANE, min(target_rows, cap_rows))
    d_max = max(1, min(m, target_rows // _SUBLANE))
    for d in range(d_max, 0, -1):
        if m % d == 0:
            return _SUBLANE * d
    return _SUBLANE


def _mlp_kernel(num_layers, compute_dtype, x_ref, *refs):
    """Fused MLP over one batch tile.

    refs = (w0, b0, w1, b1, ..., w{L-1}, b{L-1}, o_ref); ReLU after every layer
    except the last.  Matmuls run on the MXU in compute_dtype with f32
    accumulation; bias add / ReLU stay in f32 on the VPU.
    """
    o_ref = refs[-1]
    h = x_ref[...].astype(compute_dtype)          # cast in VMEM (no HBM pass)
    for li in range(num_layers):
        w = refs[2 * li][...]                     # (k, n), already compute_dtype
        b = refs[2 * li + 1][...]                 # (1, n), f32
        acc = jnp.dot(h, w, preferred_element_type=jnp.float32)
        z = acc + b
        if li != num_layers - 1:
            h = jnp.maximum(z, 0.0).astype(compute_dtype)   # carry bf16
        else:
            h = z                                            # last layer: no ReLU
    o_ref[...] = h.astype(o_ref.dtype)


def pack_params(weights, biases, compute_dtype=jnp.bfloat16):
    """One-time parameter packing (done OUTSIDE the forward hot path).

    weights: list of [D_i, D_{i+1}]  (PyTorch nn.Linear weight transposed)
    biases:  list of [D_{i+1}]
    """
    w_packed = tuple(jnp.asarray(w).astype(compute_dtype) for w in weights)
    b_packed = tuple(jnp.asarray(b).astype(jnp.float32).reshape(1, -1) for b in biases)
    return w_packed, b_packed


def make_lineage_nn_forward(weights, biases, *, compute_dtype=jnp.bfloat16,
                            batch_tile_target=512):
    """Returns a jitted forward(x) for LineageNN with the given parameters."""
    num_layers = len(weights)
    assert len(biases) == num_layers and num_layers >= 1
    dims = [int(weights[0].shape[0])] + [int(w.shape[1]) for w in weights]
    for li, w in enumerate(weights):
        assert int(w.shape[0]) == dims[li]
        assert int(biases[li].shape[0]) == dims[li + 1]

    w_packed, b_packed = pack_params(weights, biases, compute_dtype)
    param_bytes = (sum(int(w.size) * w.dtype.itemsize for w in w_packed)
                   + sum(int(b.size) * 4 for b in b_packed))

    d_in, d_out = dims[0], dims[-1]
    c_itemsize = jnp.dtype(compute_dtype).itemsize

    def _forward(x):
        assert x.ndim == 2 and x.shape[1] == d_in
        B = int(x.shape[0])
        x_itemsize = jnp.dtype(x.dtype).itemsize

        # ---- batch tiling (no padding beyond a multiple of 8 rows) ---------
        b8 = _round_up(B, _SUBLANE)
        per_row_bytes = (2 * (d_in + d_out) * x_itemsize                 # I/O tiles (dbl-buf)
                         + sum(dims[1:]) * (4 + c_itemsize))             # live intermediates
        avail = _VMEM_BUDGET - 2 * param_bytes - (2 << 20)
        if avail > 0:
            max_rows = max(_SUBLANE,
                           (avail // max(per_row_bytes, 1)) // _SUBLANE * _SUBLANE)
            target = min(batch_tile_target, max_rows)
        else:
            # Params alone blow the budget; see TODO(synk) at top (K/N tiling).
            target = _SUBLANE
        batch_tile = _choose_batch_tile(b8, target)
        grid = (b8 // batch_tile,)

        x_p = x if b8 == B else jnp.pad(x, ((0, b8 - B), (0, 0)))

        # ---- specs ----------------------------------------------------------
        in_specs = [pl.BlockSpec((batch_tile, d_in), lambda i: (i, 0))]
        for li in range(num_layers):
            in_specs.append(pl.BlockSpec(w_packed[li].shape, lambda i: (0, 0)))
            in_specs.append(pl.BlockSpec(b_packed[li].shape, lambda i: (0, 0)))
        out_spec = pl.BlockSpec((batch_tile, d_out), lambda i: (i, 0))

        vmem_need = 2 * param_bytes + batch_tile * per_row_bytes + (2 << 20)
        vmem_limit = int(min(_VMEM_BUDGET, max(vmem_need, 32 * 1024 * 1024)))

        flops = 2 * b8 * sum(dims[i] * dims[i + 1] for i in range(num_layers))
        bytes_accessed = (b8 * d_in * x_itemsize + param_bytes
                          + b8 * d_out * x_itemsize)
        cost = pl.CostEstimate(flops=flops, transcendentals=0,
                               bytes_accessed=bytes_accessed)

        kernel = functools.partial(_mlp_kernel, num_layers, compute_dtype)
        out_p = pl.pallas_call(
            kernel,
            out_shape=jax.ShapeDtypeStruct((b8, d_out), x.dtype),
            grid_spec=pltpu.PrefetchScalarGridSpec(
                num_scalar_prefetch=0,
                grid=grid,
                in_specs=in_specs,
                out_specs=out_spec,
            ),
            compiler_params=pltpu.CompilerParams(
                dimension_semantics=("parallel",),
                vmem_limit_bytes=vmem_limit,
            ),
            cost_estimate=cost,
        )(x_p, *[r for li in range(num_layers)
                 for r in (w_packed[li], b_packed[li])])

        return out_p if b8 == B else out_p[:B]

    return jax.jit(_forward)


def init_params(key, layer_sizes):
    """Deterministic init with nn.Linear-compatible shapes (W stored [in, out])."""
    weights, biases = [], []
    for i in range(len(layer_sizes) - 1):
        fan_in, fan_out = layer_sizes[i], layer_sizes[i + 1]
        key, kw, kb = jax.random.split(key, 3)
        bound = 1.0 / jnp.sqrt(fan_in)
        w = jax.random.uniform(kw, (fan_in, fan_out), jnp.float32, -bound, bound)
        b = jax.random.uniform(kb, (fan_out,), jnp.float32, -bound, bound)
        weights.append(w)
        biases.append(b)
    return weights, biases


def reference_forward(x, weights, biases):
    h = x
    n = len(weights)
    for i, (w, b) in enumerate(zip(weights, biases)):
        h = h @ w + b
        if i != n - 1:
            h = jnp.maximum(h, 0.0)
    return h


if __name__ == "__main__":
    # LineageNN(layers=[16, 32, 32, 4]) on a batch of 8 samples.
    layer_sizes = [16, 32, 32, 4]
    batch = 8

    key = jax.random.PRNGKey(0)
    key, kx = jax.random.split(key)
    x = jax.random.normal(kx, (batch, layer_sizes[0]), jnp.float32)
    weights, biases = init_params(key, layer_sizes)

    ref = reference_forward(x, weights, biases)

    # f32 compute path: exact-semantics check.
    fwd_f32 = make_lineage_nn_forward(weights, biases, compute_dtype=jnp.float32)
    out_f32 = jax.block_until_ready(fwd_f32(x))
    assert out_f32.shape == (batch, layer_sizes[-1])
    assert jnp.allclose(out_f32, ref, atol=1e-5, rtol=1e-5), "f32 mismatch vs reference"

    # Default optimized path (bf16 MXU operands, f32 accumulation).
    fwd_bf16 = make_lineage_nn_forward(weights, biases)
    out_bf16 = jax.block_until_ready(fwd_bf16(x))
    assert out_bf16.shape == (batch, layer_sizes[-1])
    assert jnp.allclose(out_bf16, ref, atol=3e-2, rtol=3e-2), "bf16 mismatch vs reference"

    print("KERNEL_OK")
</pallas_src>

<mosaic_0001>
module attributes {stable_mosaic.version = 11 : i64} {
  func.func @_mlp_kernel(%arg0: i32, %arg1: memref<8x16xf32, #tpu.memory_space<vmem>>, %arg2: memref<16x32xf32, #tpu.memory_space<vmem>>, %arg3: memref<1x32xf32, #tpu.memory_space<vmem>>, %arg4: memref<32x32xf32, #tpu.memory_space<vmem>>, %arg5: memref<1x32xf32, #tpu.memory_space<vmem>>, %arg6: memref<32x4xf32, #tpu.memory_space<vmem>>, %arg7: memref<1x4xf32, #tpu.memory_space<vmem>>, %arg8: memref<8x4xf32, #tpu.memory_space<vmem>>) attributes {dimension_semantics = [#tpu.dimension_semantics<parallel>], iteration_bounds = array<i64: 1>, scalar_prefetch = 0 : i64, scratch_operands = 0 : i64, tpu.core_type = #tpu.core_type<tc>, window_params = [{transform_indices = @transform_0, window_bounds = array<i64: 8, 16>}, {pipeline_mode = #tpu.pipeline_mode<synchronous>, transform_indices = @transform_1, window_bounds = array<i64: 16, 32>}, {pipeline_mode = #tpu.pipeline_mode<synchronous>, transform_indices = @transform_2, window_bounds = array<i64: 1, 32>}, {pipeline_mode = #tpu.pipeline_mode<synchronous>, transform_indices = @transform_3, window_bounds = array<i64: 32, 32>}, {pipeline_mode = #tpu.pipeline_mode<synchronous>, transform_indices = @transform_4, window_bounds = array<i64: 1, 32>}, {pipeline_mode = #tpu.pipeline_mode<synchronous>, transform_indices = @transform_5, window_bounds = array<i64: 32, 4>}, {pipeline_mode = #tpu.pipeline_mode<synchronous>, transform_indices = @transform_6, window_bounds = array<i64: 1, 4>}, {transform_indices = @transform_7, window_bounds = array<i64: 8, 4>}]} {
    %c0 = arith.constant 0 : index
    %c0_0 = arith.constant 0 : index
    %0 = vector.load %arg1[%c0, %c0_0] : memref<8x16xf32, #tpu.memory_space<vmem>>, vector<8x16xf32>
    %c0_1 = arith.constant 0 : index
    %c0_2 = arith.constant 0 : index
    %1 = vector.load %arg2[%c0_1, %c0_2] : memref<16x32xf32, #tpu.memory_space<vmem>>, vector<16x32xf32>
    %c0_3 = arith.constant 0 : index
    %c0_4 = arith.constant 0 : index
    %2 = vector.load %arg3[%c0_3, %c0_4] : memref<1x32xf32, #tpu.memory_space<vmem>>, vector<1x32xf32>
    %cst = arith.constant dense<0.000000e+00> : vector<8x32xf32>
    %3 = tpu.matmul %0, %1, %cst {dimension_numbers = #tpu.dot_dimension_numbers<[1], [0], [0], [1], [0, 0, 1, 1], [], []>} : vector<8x16xf32>, vector<16x32xf32>, vector<8x32xf32> -> vector<8x32xf32>
    %4 = vector.broadcast %2 : vector<1x32xf32> to vector<8x32xf32>
    %5 = arith.addf %3, %4 : vector<8x32xf32>
    %cst_5 = arith.constant 0.000000e+00 : f32
    %6 = vector.broadcast %cst_5 : f32 to vector<8x32xf32>
    %7 = arith.maximumf %5, %6 : vector<8x32xf32>
    %c0_6 = arith.constant 0 : index
    %c0_7 = arith.constant 0 : index
    %8 = vector.load %arg4[%c0_6, %c0_7] : memref<32x32xf32, #tpu.memory_space<vmem>>, vector<32x32xf32>
    %c0_8 = arith.constant 0 : index
    %c0_9 = arith.constant 0 : index
    %9 = vector.load %arg5[%c0_8, %c0_9] : memref<1x32xf32, #tpu.memory_space<vmem>>, vector<1x32xf32>
    %cst_10 = arith.constant dense<0.000000e+00> : vector<8x32xf32>
    %10 = tpu.matmul %7, %8, %cst_10 {dimension_numbers = #tpu.dot_dimension_numbers<[1], [0], [0], [1], [0, 0, 1, 1], [], []>} : vector<8x32xf32>, vector<32x32xf32>, vector<8x32xf32> -> vector<8x32xf32>
    %11 = vector.broadcast %9 : vector<1x32xf32> to vector<8x32xf32>
    %12 = arith.addf %10, %11 : vector<8x32xf32>
    %cst_11 = arith.constant 0.000000e+00 : f32
    %13 = vector.broadcast %cst_11 : f32 to vector<8x32xf32>
    %14 = arith.maximumf %12, %13 : vector<8x32xf32>
    %c0_12 = arith.constant 0 : index
    %c0_13 = arith.constant 0 : index
    %15 = vector.load %arg6[%c0_12, %c0_13] : memref<32x4xf32, #tpu.memory_space<vmem>>, vector<32x4xf32>
    %c0_14 = arith.constant 0 : index
    %c0_15 = arith.constant 0 : index
    %16 = vector.load %arg7[%c0_14, %c0_15] : memref<1x4xf32, #tpu.memory_space<vmem>>, vector<1x4xf32>
    %cst_16 = arith.constant dense<0.000000e+00> : vector<8x4xf32>
    %17 = tpu.matmul %14, %15, %cst_16 {dimension_numbers = #tpu.dot_dimension_numbers<[1], [0], [0], [1], [0, 0, 1, 1], [], []>} : vector<8x32xf32>, vector<32x4xf32>, vector<8x4xf32> -> vector<8x4xf32>
    %18 = vector.broadcast %16 : vector<1x4xf32> to vector<8x4xf32>
    %19 = arith.addf %17, %18 : vector<8x4xf32>
    %c0_17 = arith.constant 0 : index
    %c0_18 = arith.constant 0 : index
    %20 = vector.load %arg8[%c0_17, %c0_18] : memref<8x4xf32, #tpu.memory_space<vmem>>, vector<8x4xf32>
    tpu.vector_store %arg8[%c0_17, %c0_18], %19 {strides = array<i32>} : memref<8x4xf32, #tpu.memory_space<vmem>>, vector<8x4xf32>,
    return
  }
  func.func @transform_0(%arg0: i32) -> (i32, i32) {
    %c0_i32 = arith.constant 0 : i32
    %c0_i32_0 = arith.constant 0 : i32
    return %arg0, %c0_i32 : i32, i32
  }
  func.func @transform_1(%arg0: i32) -> (i32, i32) {
    %c0_i32 = arith.constant 0 : i32
    %c0_i32_0 = arith.constant 0 : i32
    %c0_i32_1 = arith.constant 0 : i32
    return %c0_i32, %c0_i32_0 : i32, i32
  }
  func.func @transform_2(%arg0: i32) -> (i32, i32) {
    %c0_i32 = arith.constant 0 : i32
    %c0_i32_0 = arith.constant 0 : i32
    %c0_i32_1 = arith.constant 0 : i32
    return %c0_i32, %c0_i32_0 : i32, i32
  }
  func.func @transform_3(%arg0: i32) -> (i32, i32) {
    %c0_i32 = arith.constant 0 : i32
    %c0_i32_0 = arith.constant 0 : i32
    %c0_i32_1 = arith.constant 0 : i32
    return %c0_i32, %c0_i32_0 : i32, i32
  }
  func.func @transform_4(%arg0: i32) -> (i32, i32) {
    %c0_i32 = arith.constant 0 : i32
    %c0_i32_0 = arith.constant 0 : i32
    %c0_i32_1 = arith.constant 0 : i32
    return %c0_i32, %c0_i32_0 : i32, i32
  }
  func.func @transform_5(%arg0: i32) -> (i32, i32) {
    %c0_i32 = arith.constant 0 : i32
    %c0_i32_0 = arith.constant 0 : i32
    %c0_i32_1 = arith.constant 0 : i32
    return %c0_i32, %c0_i32_0 : i32, i32
  }
  func.func @transform_6(%arg0: i32) -> (i32, i32) {
    %c0_i32 = arith.constant 0 : i32
    %c0_i32_0 = arith.constant 0 : i32
    %c0_i32_1 = arith.constant 0 : i32
    return %c0_i32, %c0_i32_0 : i32, i32
  }
  func.func @transform_7(%arg0: i32) -> (i32, i32) {
    %c0_i32 = arith.constant 0 : i32
    %c0_i32_0 = arith.constant 0 : i32
    return %arg0, %c0_i32 : i32, i32
  }
}

</mosaic_0001>

<llo_original>
// kernel: _forward.1
$region0: #{_forward.1}
  #allocation0 [shape = 'u32[]', space=smem, size = 0x4, offset = 0x4, fixed_abs, tag = 'smem constant byte address 0x4 - core index']
  #allocation1 [shape = 'u32[144,128]{1,0:T(1,128)}', space=vmem, size = 0x12000, scoped, tag = 'internal scratch']
  %s0 = inlined_call_operand.hbm [shape: f32[8,16], index: 0, kind: input, shape index: {}]
  %s1 = inlined_call_operand.hbm [shape: f32[16,32], index: 1, kind: input, shape index: {}]
  %s2 = inlined_call_operand.vmem [shape: f32[1,32], index: 2, kind: input, shape index: {}]
  %s3 = inlined_call_operand.hbm [shape: f32[32,32], index: 3, kind: input, shape index: {}]
  %s4 = inlined_call_operand.vmem [shape: f32[1,32], index: 4, kind: input, shape index: {}]
  %s5 = inlined_call_operand.hbm [shape: f32[32,4], index: 5, kind: input, shape index: {}]
  %s6 = inlined_call_operand.vmem [shape: f32[1,4], index: 6, kind: input, shape index: {}]
  %s7 = inlined_call_operand.vmem [shape: f32[8,4], index: 7, kind: output, shape index: {}]
  %s8 = sld [smem:[#allocation0]]
  $region54: #{_forward.1} parent=0
    _
  %s10 = ssub.s32 1, %s8
  %s11 = scalar_select 0, %s10, %s8
  $region1: #{_forward.1} parent=0
    #allocation2 [shape = 'u8[4096]{0}', space=vmem, size = 0x1000, scoped, tag = 'input window, operand 0, single buffered']
    #allocation3 [shape = 's32[1]{0}', space=sflag, size = 0x4, scoped, tag = 'scoped memory for _forward.1']
    #allocation4 [shape = 'u8[8192]{0}', space=vmem, size = 0x2000, scoped, tag = 'input window, operand 1, single buffered']
    #allocation5 [shape = 's32[1]{0}', space=sflag, size = 0x4, scoped, tag = 'scoped memory for _forward.1']
    #allocation6 [shape = 'u8[16384]{0}', space=vmem, size = 0x4000, scoped, tag = 'input window, operand 3, single buffered']
    #allocation7 [shape = 'u8[16384]{0}', space=vmem, size = 0x4000, scoped, tag = 'input window, operand 5, single buffered']
    #allocation8 [shape = 's32[1]{0}', space=sflag, size = 0x4, scoped, tag = 'scoped memory for _forward.1']
    %12 = vsyncpa [#allocation3], 0
    %13 = vsyncpa [#allocation5], 0
    %14 = vsyncpa [#allocation8], 0
    // Predicated region
    $region2: #{_forward.1} parent=1 // pred_check
      _
    $region3: #{_forward.1} parent=1 // pred_check_branch
      %16 = sbr.rel (0) target = $region5
    $region4: #{_forward.1} parent=1 // pred_region
      %s18 = ssub.s32 128, 128
      %19 = vsyncadd [#allocation3], %s18
      %s21 = sshll.u32 [#allocation2], 4
      %s22 = int_to_ptr.vmem [resolvable:$true] %s21
      %24 = dma.hbm_to_vmem [thread:$0]  %s0, 128, %s22, [#allocation3]
    $region5: #{_forward.1} parent=1 // pred_fallthru
      _
    // Predicated region
    $region6: #{_forward.1} parent=1 // pred_check
      _
    $region7: #{_forward.1} parent=1 // pred_check_branch
      %26 = sbr.rel (0) target = $region9
    $region8: #{_forward.1} parent=1 // pred_region
      %s28 = ssub.s32 256, 256
      %29 = vsyncadd [#allocation5], %s28
      %s30 = sshll.u32 [#allocation4], 4
      %s31 = int_to_ptr.vmem [resolvable:$true] %s30
      %36 = dma.hbm_to_vmem [thread:$0]  %s1, 256, %s31, [#allocation5], 128, 128, 8
    $region9: #{_forward.1} parent=1 // pred_fallthru
      _
    // Predicated region
    $region10: #{_forward.1} parent=1 // pred_check
      _
    $region11: #{_forward.1} parent=1 // pred_check_branch
      %38 = sbr.rel (0) target = $region13
    $region12: #{_forward.1} parent=1 // pred_region
      _
    $region13: #{_forward.1} parent=1 // pred_fallthru
      _
    // Predicated region
    $region14: #{_forward.1} parent=1 // pred_check
      _
    $region15: #{_forward.1} parent=1 // pred_check_branch
      %40 = sbr.rel (0) target = $region17
    $region16: #{_forward.1} parent=1 // pred_region
      %s42 = ssub.s32 512, 512
      %43 = vsyncadd [#allocation5], %s42
      %s44 = sshll.u32 [#allocation6], 4
      %s45 = int_to_ptr.vmem [resolvable:$true] %s44
      %50 = dma.hbm_to_vmem [thread:$0]  %s3, 512, %s45, [#allocation5], 128, 128, 8
    $region17: #{_forward.1} parent=1 // pred_fallthru
      _
    // Predicated region
    $region18: #{_forward.1} parent=1 // pred_check
      _
    $region19: #{_forward.1} parent=1 // pred_check_branch
      %52 = sbr.rel (0) target = $region21
    $region20: #{_forward.1} parent=1 // pred_region
      _
    $region21: #{_forward.1} parent=1 // pred_fallthru
      _
    // Predicated region
    $region22: #{_forward.1} parent=1 // pred_check
      _
    $region23: #{_forward.1} parent=1 // pred_check_branch
      %54 = sbr.rel (0) target = $region25
    $region24: #{_forward.1} parent=1 // pred_region
      %s56 = ssub.s32 512, 512
      %57 = vsyncadd [#allocation8], %s56
      %s58 = sshll.u32 [#allocation7], 4
      %s59 = int_to_ptr.vmem [resolvable:$true] %s58
      %64 = dma.hbm_to_vmem [thread:$0]  %s5, 512, %s59, [#allocation8], 128, 128, 8
    $region25: #{_forward.1} parent=1 // pred_fallthru
      _
    // Predicated region
    $region26: #{_forward.1} parent=1 // pred_check
      _
    $region27: #{_forward.1} parent=1 // pred_check_branch
      %66 = sbr.rel (0) target = $region29
    $region28: #{_forward.1} parent=1 // pred_region
      _
    $region29: #{_forward.1} parent=1 // pred_fallthru
      _
    // Predicated region
    $region30: #{_forward.1} parent=1 // pred_check
      _
    $region31: #{_forward.1} parent=1 // pred_check_branch
      %68 = sbr.rel (0) target = $region33
    $region32: #{_forward.1} parent=1 // pred_region
      %69 = dma.done [#allocation3], 128
    $region33: #{_forward.1} parent=1 // pred_fallthru
      _
    // Predicated region
    $region34: #{_forward.1} parent=1 // pred_check
      _
    $region35: #{_forward.1} parent=1 // pred_check_branch
      %71 = sbr.rel (0) target = $region37
    $region36: #{_forward.1} parent=1 // pred_region
      %72 = dma.done [#allocation5], 256
    $region37: #{_forward.1} parent=1 // pred_fallthru
      _
    // Predicated region
    $region38: #{_forward.1} parent=1 // pred_check
      _
    $region39: #{_forward.1} parent=1 // pred_check_branch
      %74 = sbr.rel (0) target = $region41
    $region40: #{_forward.1} parent=1 // pred_region
      %75 = dma.done [#allocation5], 512
    $region41: #{_forward.1} parent=1 // pred_fallthru
      _
    // Predicated region
    $region42: #{_forward.1} parent=1 // pred_check
      _
    $region43: #{_forward.1} parent=1 // pred_check_branch
      %77 = sbr.rel (0) target = $region45
    $region44: #{_forward.1} parent=1 // pred_region
      %78 = dma.done [#allocation8], 512
    $region45: #{_forward.1} parent=1 // pred_fallthru
      _
    %v79 = vld [vmem:[#allocation2] sm:$0xff]
    %v80 = vld [vmem:[#allocation4] sm:$0xff]
    %v81 = vld [vmem:[#allocation4 + $0x8] sm:$0xff]
    %v82 = vld [vmem:[%s2] sm:$0x1]
    %v84 = vlaneseq
    %v85 = vshrl.u32 %v84, 7
    %v86 = vsub.s32 0, %v85
    %v87 = vrot.slane %v82, %v86
    %vm89 = vcmask 130048
    %v91 = vsel %vm89, %v79, 0
    %93 = vmatprep.subr.mxu0 0.0
    %94 = vmatpush1.msra.mxu0 %v80
    %95 = vmatprep.subr.mxu0 0.0
    %96 = vmatpush1.msra.mxu0 %v81
    %97 = vmatprep.subr.mxu0 0.0
    %98 = vmatpush1.msra.mxu0 0.0
    %99 = vmatprep.subr.mxu0 0.0
    %100 = vmatpush1.msra.mxu0 0.0
    %101 = vmatprep.subr.mxu0 0.0
    %102 = vmatpush1.msra.mxu0 0.0
    %103 = vmatprep.subr.mxu0 0.0
    %104 = vmatpush1.msra.mxu0 0.0
    %105 = vmatprep.subr.mxu0 0.0
    %106 = vmatpush1.msra.mxu0 0.0
    %107 = vmatprep.subr.mxu0 0.0
    %108 = vmatpush1.msra.mxu0 0.0
    %109 = vmatprep.subr.mxu0 0.0
    %110 = vmatpush1.msra.mxu0 0.0
    %111 = vmatprep.subr.mxu0 0.0
    %112 = vmatpush1.msra.mxu0 0.0
    %113 = vmatprep.subr.mxu0 0.0
    %114 = vmatpush1.msra.mxu0 0.0
    %115 = vmatprep.subr.mxu0 0.0
    %116 = vmatpush1.msra.mxu0 0.0
    %117 = vmatprep.subr.mxu0 0.0
    %118 = vmatpush1.msra.mxu0 0.0
    %119 = vmatprep.subr.mxu0 0.0
    %120 = vmatpush1.msra.mxu0 0.0
    %121 = vmatprep.subr.mxu0 0.0
    %122 = vmatpush1.msra.mxu0 0.0
    %123 = vmatprep.subr.mxu0 0.0
    %124 = vmatpush1.msra.mxu0 0.0
    %125 = vmatprep.subr.mxu0 0.0
    %126 = vmatpush1.msra.mxu0 0.0
    %127 = vmatprep.subr.mxu0 0.0
    %128 = vmatpush1.msra.mxu0 0.0
    %129 = vmatprep.subr.mxu0 0.0
    %130 = vmatpush1.msra.mxu0 0.0
    %131 = vmatprep.subr.mxu0 0.0
    %132 = vmatpush1.msra.mxu0 0.0
    %133 = vmatprep.subr.mxu0 0.0
    %134 = vmatpush1.msra.mxu0 0.0
    %135 = vmatprep.subr.mxu0 0.0
    %136 = vmatpush1.msra.mxu0 0.0
    %137 = vmatprep.subr.mxu0 0.0
    %138 = vmatpush1.msra.mxu0 0.0
    %139 = vmatprep.subr.mxu0 0.0
    %140 = vmatpush1.msra.mxu0 0.0
    %141 = vmatprep.subr.mxu0 0.0
    %142 = vmatpush1.msra.mxu0 0.0
    %143 = vmatprep.subr.mxu0 0.0
    %144 = vmatpush1.msra.mxu0 0.0
    %145 = vmatprep.subr.mxu0 0.0
    %146 = vmatpush1.msra.mxu0 0.0
    %147 = vmatprep.subr.mxu0 0.0
    %148 = vmatpush1.msra.mxu0 0.0
    %149 = vmatprep.subr.mxu0 0.0
    %150 = vmatpush1.msra.mxu0 0.0
    %151 = vmatprep.subr.mxu0 0.0
    %152 = vmatpush1.msra.mxu0 0.0
    %153 = vmatprep.subr.mxu0 0.0
    %154 = vmatpush1.msra.mxu0 0.0
    %155 = vmatprep.subr.mxu0 0.0
    %156 = vmatpush1.msra.mxu0 0.0
    %157 = vmatprep.mubr.f32.mxu0 0.0
    %158 = vmatmul.mubr.f32.gmra.mrb[0].mxu0 %v91
    %v159 = vpop.f32.mrb[0].mxu0
    %v160 = vadd.f32 %v87, %v159
    %v161 = vpop.f32.mrb[0].mxu0
    %162 = vdwg.mxu0
    %v163 = vmax.f32 %v160, 0.0
    %v164 = vld [vmem:[#allocation6] sm:$0xff]
    %v165 = vld [vmem:[#allocation6 + $0x8] sm:$0xff]
    %v166 = vld [vmem:[#allocation6 + $0x10] sm:$0xff]
    %v167 = vld [vmem:[#allocation6 + $0x18] sm:$0xff]
    %v168 = vld [vmem:[%s4] sm:$0x1]
    %v170 = vlaneseq
    %v171 = vshrl.u32 %v170, 7
    %v172 = vsub.s32 0, %v171
    %v173 = vrot.slane %v168, %v172
    %vm175 = vcmask 261120
    %v177 = vsel %vm175, %v163, 0
    %179 = vmatprep.subr.mxu0 0.0
    %180 = vmatpush1.msra.mxu0 %v164
    %181 = vmatprep.subr.mxu0 0.0
    %182 = vmatpush1.msra.mxu0 %v165
    %183 = vmatprep.subr.mxu0 0.0
    %184 = vmatpush1.msra.mxu0 %v166
    %185 = vmatprep.subr.mxu0 0.0
    %186 = vmatpush1.msra.mxu0 %v167
    %187 = vmatprep.subr.mxu0 0.0
    %188 = vmatpush1.msra.mxu0 0.0
    %189 = vmatprep.subr.mxu0 0.0
    %190 = vmatpush1.msra.mxu0 0.0
    %191 = vmatprep.subr.mxu0 0.0
    %192 = vmatpush1.msra.mxu0 0.0
    %193 = vmatprep.subr.mxu0 0.0
    %194 = vmatpush1.msra.mxu0 0.0
    %195 = vmatprep.subr.mxu0 0.0
    %196 = vmatpush1.msra.mxu0 0.0
    %197 = vmatprep.subr.mxu0 0.0
    %198 = vmatpush1.msra.mxu0 0.0
    %199 = vmatprep.subr.mxu0 0.0
    %200 = vmatpush1.msra.mxu0 0.0
    %201 = vmatprep.subr.mxu0 0.0
    %202 = vmatpush1.msra.mxu0 0.0
    %203 = vmatprep.subr.mxu0 0.0
    %204 = vmatpush1.msra.mxu0 0.0
    %205 = vmatprep.subr.mxu0 0.0
    %206 = vmatpush1.msra.mxu0 0.0
    %207 = vmatprep.subr.mxu0 0.0
    %208 = vmatpush1.msra.mxu0 0.0
    %209 = vmatprep.subr.mxu0 0.0
    %210 = vmatpush1.msra.mxu0 0.0
    %211 = vmatprep.subr.mxu0 0.0
    %212 = vmatpush1.msra.mxu0 0.0
    %213 = vmatprep.subr.mxu0 0.0
    %214 = vmatpush1.msra.mxu0 0.0
    %215 = vmatprep.subr.mxu0 0.0
    %216 = vmatpush1.msra.mxu0 0.0
    %217 = vmatprep.subr.mxu0 0.0
    %218 = vmatpush1.msra.mxu0 0.0
    %219 = vmatprep.subr.mxu0 0.0
    %220 = vmatpush1.msra.mxu0 0.0
    %221 = vmatprep.subr.mxu0 0.0
    %222 = vmatpush1.msra.mxu0 0.0
    %223 = vmatprep.subr.mxu0 0.0
    %224 = vmatpush1.msra.mxu0 0.0
    %225 = vmatprep.subr.mxu0 0.0
    %226 = vmatpush1.msra.mxu0 0.0
    %227 = vmatprep.subr.mxu0 0.0
    %228 = vmatpush1.msra.mxu0 0.0
    %229 = vmatprep.subr.mxu0 0.0
    %230 = vmatpush1.msra.mxu0 0.0
    %231 = vmatprep.subr.mxu0 0.0
    %232 = vmatpush1.msra.mxu0 0.0
    %233 = vmatprep.subr.mxu0 0.0
    %234 = vmatpush1.msra.mxu0 0.0
    %235 = vmatprep.subr.mxu0 0.0
    %236 = vmatpush1.msra.mxu0 0.0
    %237 = vmatprep.subr.mxu0 0.0
    %238 = vmatpush1.msra.mxu0 0.0
    %239 = vmatprep.subr.mxu0 0.0
    %240 = vmatpush1.msra.mxu0 0.0
    %241 = vmatprep.subr.mxu0 0.0
    %242 = vmatpush1.msra.mxu0 0.0
    %243 = vmatprep.mubr.f32.mxu0 0.0
    %244 = vmatmul.mubr.f32.gmra.mrb[0].mxu0 %v177
    %v245 = vpop.f32.mrb[0].mxu0
    %v246 = vadd.f32 %v173, %v245
    %v247 = vpop.f32.mrb[0].mxu0
    %248 = vdwg.mxu0
    %v249 = vmax.f32 %v246, 0.0
    %v250 = vld [vmem:[#allocation7] sm:$0xff]
    %v251 = vld [vmem:[#allocation7 + $0x8] sm:$0xff]
    %v252 = vld [vmem:[#allocation7 + $0x10] sm:$0xff]
    %v253 = vld [vmem:[#allocation7 + $0x18] sm:$0xff]
    %v254 = vld [vmem:[%s6] sm:$0x1]
    %v256 = vlaneseq
    %v257 = vshrl.u32 %v256, 7
    %v258 = vsub.s32 0, %v257
    %v259 = vrot.slane %v254, %v258
    %v262 = vsel %vm175, %v249, 0
    %264 = vmatprep.subr.mxu0 0.0
    %265 = vmatpush1.msra.mxu0 %v250
    %266 = vmatprep.subr.mxu0 0.0
    %267 = vmatpush1.msra.mxu0 %v251
    %268 = vmatprep.subr.mxu0 0.0
    %269 = vmatpush1.msra.mxu0 %v252
    %270 = vmatprep.subr.mxu0 0.0
    %271 = vmatpush1.msra.mxu0 %v253
    %272 = vmatprep.subr.mxu0 0.0
    %273 = vmatpush1.msra.mxu0 0.0
    %274 = vmatprep.subr.mxu0 0.0
    %275 = vmatpush1.msra.mxu0 0.0
    %276 = vmatprep.subr.mxu0 0.0
    %277 = vmatpush1.msra.mxu0 0.0
    %278 = vmatprep.subr.mxu0 0.0
    %279 = vmatpush1.msra.mxu0 0.0
    %280 = vmatprep.subr.mxu0 0.0
    %281 = vmatpush1.msra.mxu0 0.0
    %282 = vmatprep.subr.mxu0 0.0
    %283 = vmatpush1.msra.mxu0 0.0
    %284 = vmatprep.subr.mxu0 0.0
    %285 = vmatpush1.msra.mxu0 0.0
    %286 = vmatprep.subr.mxu0 0.0
    %287 = vmatpush1.msra.mxu0 0.0
    %288 = vmatprep.subr.mxu0 0.0
    %289 = vmatpush1.msra.mxu0 0.0
    %290 = vmatprep.subr.mxu0 0.0
    %291 = vmatpush1.msra.mxu0 0.0
    %292 = vmatprep.subr.mxu0 0.0
    %293 = vmatpush1.msra.mxu0 0.0
    %294 = vmatprep.subr.mxu0 0.0
    %295 = vmatpush1.msra.mxu0 0.0
    %296 = vmatprep.subr.mxu0 0.0
    %297 = vmatpush1.msra.mxu0 0.0
    %298 = vmatprep.subr.mxu0 0.0
    %299 = vmatpush1.msra.mxu0 0.0
    %300 = vmatprep.subr.mxu0 0.0
    %301 = vmatpush1.msra.mxu0 0.0
    %302 = vmatprep.subr.mxu0 0.0
    %303 = vmatpush1.msra.mxu0 0.0
    %304 = vmatprep.subr.mxu0 0.0
    %305 = vmatpush1.msra.mxu0 0.0
    %306 = vmatprep.subr.mxu0 0.0
    %307 = vmatpush1.msra.mxu0 0.0
    %308 = vmatprep.subr.mxu0 0.0
    %309 = vmatpush1.msra.mxu0 0.0
    %310 = vmatprep.subr.mxu0 0.0
    %311 = vmatpush1.msra.mxu0 0.0
    %312 = vmatprep.subr.mxu0 0.0
    %313 = vmatpush1.msra.mxu0 0.0
    %314 = vmatprep.subr.mxu0 0.0
    %315 = vmatpush1.msra.mxu0 0.0
    %316 = vmatprep.subr.mxu0 0.0
    %317 = vmatpush1.msra.mxu0 0.0
    %318 = vmatprep.subr.mxu0 0.0
    %319 = vmatpush1.msra.mxu0 0.0
    %320 = vmatprep.subr.mxu0 0.0
    %321 = vmatpush1.msra.mxu0 0.0
    %322 = vmatprep.subr.mxu0 0.0
    %323 = vmatpush1.msra.mxu0 0.0
    %324 = vmatprep.subr.mxu0 0.0
    %325 = vmatpush1.msra.mxu0 0.0
    %326 = vmatprep.subr.mxu0 0.0
    %327 = vmatpush1.msra.mxu0 0.0
    %328 = vmatprep.mubr.f32.mxu0 0.0
    %329 = vmatmul.mubr.f32.gmra.mrb[0].mxu0 %v262
    %v330 = vpop.f32.mrb[0].mxu0
    %v331 = vadd.f32 %v259, %v330
    %v332 = vpop.f32.mrb[0].mxu0
    %333 = vdwg.mxu0
    %vm334 = vcmask 31744
    %335 = vst.msk [vmem:[%s7] sm:$0xff] %vm334, %v331
    // Predicated region
    $region46: #{_forward.1} parent=1 // pred_check
      _
    $region47: #{_forward.1} parent=1 // pred_check_branch
      %337 = sbr.rel (0) target = $region49
    $region48: #{_forward.1} parent=1 // pred_region
      _
    $region49: #{_forward.1} parent=1 // pred_fallthru
      _
    // Predicated region
    $region50: #{_forward.1} parent=1 // pred_check
      _
    $region51: #{_forward.1} parent=1 // pred_check_branch
      %339 = sbr.rel (0) target = $region53
    $region52: #{_forward.1} parent=1 // pred_region
      _
    $region53: #{_forward.1} parent=1 // pred_fallthru
      _
    %340 = vsyncpa [#allocation3], 1
    %341 = vsyncpa [#allocation5], 1
    %342 = vsyncpa [#allocation8], 1

</llo_original>
